<compile_context>
chip_gen: v7x
topology: tpu7x:2x2x1
jax: 0.10.0
libtpu: 0.0.40
codegen_flags: <defaults>
</compile_context>

<pallas_src>
import functools
import math

import jax
import jax.numpy as jnp
from jax.experimental import pallas as pl
from jax.experimental.pallas import tpu as pltpu

_LANE = 128
_ACC_GROUP = 4          # lane-chunks summed per accumulator read-modify-write


def _accumulate(acc_ref, x_ref, width):
    """Add spatial columns [0, width) of x_ref into the running-sum scratch.

    acc_ref is either [TB, C, 128] f32 (lane-shaped: pure elementwise VALU adds,
    cross-lane reduce deferred to the finalize) or [TB, C] f32 (compact fallback
    with a per-step reduce).  `width` is a static Python int.
    """
    if len(acc_ref.shape) == 3:
        n_full, tail = divmod(width, _LANE)
        j = 0
        while j < n_full:
            g = min(_ACC_GROUP, n_full - j)
            part = x_ref[:, :, j * _LANE:(j + 1) * _LANE].astype(jnp.float32)
            for t in range(1, g):
                lo = (j + t) * _LANE
                part = part + x_ref[:, :, lo:lo + _LANE].astype(jnp.float32)
            acc_ref[...] += part
            j += g
        if tail:
            lo = n_full * _LANE
            acc_ref[:, :, :tail] += x_ref[:, :, lo:lo + tail].astype(jnp.float32)
    else:
        acc_ref[...] += jnp.sum(x_ref[:, :, :width], axis=-1, dtype=jnp.float32)


def _route_kernel(x_ref, w1_ref, w3_ref, o_ref, acc_ref, *, hw, thw):
    # x_ref: [TB, C, THW]; w1_ref: [C, S] f32 (1/HW pre-folded);
    # w3_ref: [S, EO] f32 (depthwise scale + 2nd ReLU pre-folded);
    # o_ref: [TB, EO]; acc_ref: running spatial-sum scratch (f32).
    k = pl.program_id(1)
    k_last = pl.num_programs(1) - 1

    @pl.when(k == 0)
    def _():
        acc_ref[...] = jnp.zeros_like(acc_ref)

    rem = hw % thw                              # static Python int
    if rem == 0:
        # Common case: every tile is fully valid, no masking anywhere.
        _accumulate(acc_ref, x_ref, thw)
    else:
        # Ragged spatial tail: steady-state tiles are unmasked; the last tile
        # accumulates a static partial width (no iota/compare/select at all).
        @pl.when(k != k_last)
        def _():
            _accumulate(acc_ref, x_ref, thw)

        @pl.when(k == k_last)
        def _():
            _accumulate(acc_ref, x_ref, rem)

    @pl.when(k == k_last)
    def _():
        pooled = acc_ref[...]
        if pooled.ndim == 3:                    # lane-shaped acc: reduce once here
            pooled = jnp.sum(pooled, axis=-1)   # [TB, C] f32
        # 1x1 conv C -> S (GAP's 1/HW already folded into w1) + ReLU
        h = jnp.maximum(
            jnp.dot(pooled, w1_ref[...], preferred_element_type=jnp.float32), 0.0)
        # depthwise per-channel scale + 2nd ReLU were folded into w3 host-side.
        out = jnp.dot(h, w3_ref[...], preferred_element_type=jnp.float32)
        # Exact sigmoid (finalize-only; cost negligible).
        o_ref[...] = (1.0 / (1.0 + jnp.exp(-out))).astype(o_ref.dtype)


def _vmem_capacity_bytes():
    """Physical VMEM per TensorCore; conservative (v7x) default if unqueryable."""
    try:
        return int(pltpu.get_tpu_info().vmem_capacity_bytes)
    except Exception:
        return 64 * 1024 * 1024


def route_func_single_scale(x, w1, w2, w3, *, max_x_tile_bytes=None,
                            lane_accumulator=None):
    """x: [B, C, H, W] (NCHW). w1: [S, C, 1, 1]; w2: [S, 1, 1, 1]; w3: [EO, S, 1, 1].

    Returns the sigmoid attention [B, EO, 1, 1] (EO = num_experts * out_channels).
    `max_x_tile_bytes` / `lane_accumulator` override the automatic tiling choices
    (used by the tests to force the multi-step / fallback code paths).
    """
    B, C, H, W = x.shape
    S = w1.shape[0]
    EO = w3.shape[0]
    HW = H * W

    # Free view: NCHW -> [B, C, HW]; spatial stays on the lane axis (no transpose).
    x_flat = x.reshape(B, C, HW)

    # Host-side weight prep (tiny, traced once): fold 1/HW into w1, fold the
    # depthwise scale + 2nd ReLU into w3 (exact since h >= 0 after 1st ReLU),
    # pre-cast everything to f32.
    w1_t = jnp.transpose(w1.reshape(S, C)).astype(jnp.float32) * (1.0 / HW)  # [C, S]
    w3_t = jnp.transpose(w3.reshape(EO, S)).astype(jnp.float32)              # [S, EO]
    w3_f = jnp.maximum(w2.reshape(S, 1).astype(jnp.float32), 0.0) * w3_t

    itemsize = jnp.dtype(x.dtype).itemsize

    # ---- Batch tile ---------------------------------------------------------
    # Layout rule: the second-to-last out-block dim (TB) must be a multiple of 8
    # or the full batch extent.  Prefer >= 2 programs on the "parallel" axis so
    # both v7x TensorCores get work (B == 8 cannot be split without breaking the
    # layout rule, so it stays a single batch program).
    if B % 8 == 0 and B >= 16:
        TB = 8
    else:
        TB = B
    nb = B // TB

    # ---- Spatial tile: pure byte budget, per TPU generation -----------------
    vmem_cap = _vmem_capacity_bytes()
    big_vmem = vmem_cap >= 128 * 1024 * 1024            # v5e / v6e
    if max_x_tile_bytes is None:
        x_buf_budget = (24 if big_vmem else 12) * 1024 * 1024
    else:
        x_buf_budget = int(max_x_tile_bytes)

    row_bytes = TB * C * itemsize                       # bytes per spatial column
    if row_bytes * HW <= x_buf_budget:
        THW = HW        # single full-extent spatial step: legal for any HW,
    else:               # eliminates masking and the multi-step reduction.
        THW = max(_LANE, (x_buf_budget // row_bytes) // _LANE * _LANE)
    n_hw = pl.cdiv(HW, THW)

    # ---- Accumulator layout --------------------------------------------------
    c_pad = (C + 7) // 8 * 8
    lane_acc_bytes = TB * c_pad * _LANE * 4
    if lane_accumulator is None:
        lane_accumulator = lane_acc_bytes <= 4 * 1024 * 1024
    acc_shape = (TB, C, _LANE) if lane_accumulator else (TB, C)
    acc_bytes = lane_acc_bytes if lane_accumulator else max(TB, 8) * max(c_pad, _LANE) * 4

    # ---- VMEM limit: actual footprint + slack, capped under physical --------
    x_block_bytes = row_bytes * THW
    w_bytes = (C * S + S * EO) * 4
    out_bytes = TB * max(EO, _LANE) * itemsize
    need = (2 * x_block_bytes            # double-buffered x tiles
            + 2 * w_bytes                # resident weights (conservatively x2)
            + acc_bytes                  # f32 accumulator scratch
            + 2 * out_bytes              # output buffers
            + (8 << 20))                 # headroom for compiler-internal scratch
    vmem_limit = min(max(32 << 20, need), vmem_cap - (4 << 20))

    grid = (nb, n_hw)
    kernel = functools.partial(_route_kernel, hw=HW, thw=THW)

    cost = pl.CostEstimate(
        flops=int(B * C * HW + 2 * B * C * S + 2 * B * S * EO),
        transcendentals=int(B * EO),
        bytes_accessed=int(x_flat.size * itemsize + w_bytes + B * EO * itemsize),
    )

    out = pl.pallas_call(
        kernel,
        out_shape=jax.ShapeDtypeStruct((B, EO), x.dtype),
        grid_spec=pltpu.PrefetchScalarGridSpec(
            num_scalar_prefetch=0,
            grid=grid,
            in_specs=[
                pl.BlockSpec((TB, C, THW), lambda b, k: (b, 0, k)),
                pl.BlockSpec((C, S), lambda b, k: (0, 0)),    # resident, DMA'd once
                pl.BlockSpec((S, EO), lambda b, k: (0, 0)),   # resident, DMA'd once
            ],
            out_specs=pl.BlockSpec((TB, EO), lambda b, k: (b, 0)),
            scratch_shapes=[pltpu.VMEM(acc_shape, jnp.float32)],
        ),
        compiler_params=pltpu.CompilerParams(
            dimension_semantics=("parallel", "arbitrary"),
            vmem_limit_bytes=int(vmem_limit),
        ),
        cost_estimate=cost,
    )(x_flat, w1_t, w3_f)

    return out.reshape(B, EO, 1, 1)


def init_params(key, in_channels, out_channels, num_experts=3, reduction=16):
    """Deterministic Kaiming-uniform-like init matching PyTorch conv shapes."""
    squeeze = max(in_channels // reduction, reduction)
    k1, k2, k3 = jax.random.split(key, 3)

    def kaiming_uniform(k, shape, fan_in):
        bound = math.sqrt(6.0 / fan_in) if fan_in > 0 else 0.0
        return jax.random.uniform(k, shape, jnp.float32, -bound, bound)

    # Conv2d(in_channels, squeeze, 1, bias=False): weight [S, C, 1, 1]
    w1 = kaiming_uniform(k1, (squeeze, in_channels, 1, 1), in_channels)
    # Conv2d(squeeze, squeeze, 1, groups=squeeze, bias=False): weight [S, 1, 1, 1]
    w2 = kaiming_uniform(k2, (squeeze, 1, 1, 1), 1)
    # Conv2d(squeeze, num_experts*out_channels, 1, bias=False): [E*O, S, 1, 1]
    w3 = kaiming_uniform(k3, (num_experts * out_channels, squeeze, 1, 1), squeeze)
    return w1, w2, w3


def _reference(x, w1, w2, w3):
    """Pure-JAX reference of the PyTorch forward."""
    B, C, H, W = x.shape
    S = w1.shape[0]
    EO = w3.shape[0]
    pooled = jnp.mean(x, axis=(2, 3))                      # [B, C]
    h = pooled @ w1.reshape(S, C).T                        # [B, S]
    h = jnp.maximum(h, 0.0)
    h = h * w2.reshape(S)[None, :]
    h = jnp.maximum(h, 0.0)
    out = h @ w3.reshape(EO, S).T                          # [B, EO]
    out = jax.nn.sigmoid(out)
    return out.reshape(B, EO, 1, 1)


if __name__ == "__main__":
    key = jax.random.PRNGKey(0)
    kx, kp, kx2, kp2 = jax.random.split(key, 4)

    # Tolerance covers f32 accumulation-order / MXU differences; any structural
    # bug would be orders of magnitude larger.
    ATOL = RTOL = 1e-3
    out_channels, num_experts, reduction = 4, 3, 16

    # 1) Small default-ish shapes: single full-extent spatial step, TB == B.
    B, C, H, W = 2, 4, 16, 16
    x = jax.random.normal(kx, (B, C, H, W), jnp.float32)
    w1, w2, w3 = init_params(kp, C, out_channels, num_experts, reduction)
    attn = jax.block_until_ready(route_func_single_scale(x, w1, w2, w3))
    ref = _reference(x, w1, w2, w3)
    assert attn.shape == (B, num_experts * out_channels, 1, 1), attn.shape
    assert jnp.allclose(attn, ref, atol=ATOL, rtol=RTOL), \
        float(jnp.max(jnp.abs(attn - ref)))

    # 2) Batch-parallel grid axis (TB=8, 2 programs) + non-128-multiple HW (576)
    #    consumed as a single full-extent spatial tile (exercises the lane tail).
    B2, C2, H2, W2 = 16, 32, 24, 24
    x2 = jax.random.normal(kx2, (B2, C2, H2, W2), jnp.float32)
    w1b, w2b, w3b = init_params(kp2, C2, out_channels, num_experts, reduction)
    ref2 = _reference(x2, w1b, w2b, w3b)
    attn2 = jax.block_until_ready(route_func_single_scale(x2, w1b, w2b, w3b))
    assert attn2.shape == (B2, num_experts * out_channels, 1, 1), attn2.shape
    assert jnp.allclose(attn2, ref2, atol=ATOL, rtol=RTOL), \
        float(jnp.max(jnp.abs(attn2 - ref2)))

    # 3) Force the multi-step spatial reduction + ragged last tile (THW=128,
    #    576 % 128 = 64) with the lane-shaped accumulator.
    attn3 = jax.block_until_ready(
        route_func_single_scale(x2, w1b, w2b, w3b, max_x_tile_bytes=64 * 1024))
    assert jnp.allclose(attn3, ref2, atol=ATOL, rtol=RTOL), \
        float(jnp.max(jnp.abs(attn3 - ref2)))

    # 4) Same, with the compact [TB, C] accumulator fallback path.
    attn4 = jax.block_until_ready(
        route_func_single_scale(x2, w1b, w2b, w3b, max_x_tile_bytes=64 * 1024,
                                lane_accumulator=False))
    assert jnp.allclose(attn4, ref2, atol=ATOL, rtol=RTOL), \
        float(jnp.max(jnp.abs(attn4 - ref2)))

    print("KERNEL_OK")
</pallas_src>

<mosaic_0001>
module attributes {stable_mosaic.version = 11 : i64} {
  func.func @_route_kernel(%arg0: i32, %arg1: i32, %arg2: memref<2x4x256xf32, #tpu.memory_space<vmem>>, %arg3: memref<4x16xf32, #tpu.memory_space<vmem>>, %arg4: memref<16x12xf32, #tpu.memory_space<vmem>>, %arg5: memref<2x12xf32, #tpu.memory_space<vmem>>, %arg6: memref<2x4x128xf32, #tpu.memory_space<vmem>>) attributes {dimension_semantics = [#tpu.dimension_semantics<parallel>, #tpu.dimension_semantics<arbitrary>], iteration_bounds = array<i64: 1, 1>, scalar_prefetch = 0 : i64, scratch_operands = 1 : i64, tpu.core_type = #tpu.core_type<tc>, window_params = [{transform_indices = @transform_0, window_bounds = array<i64: 2, 4, 256>}, {pipeline_mode = #tpu.pipeline_mode<synchronous>, transform_indices = @transform_1, window_bounds = array<i64: 4, 16>}, {pipeline_mode = #tpu.pipeline_mode<synchronous>, transform_indices = @transform_2, window_bounds = array<i64: 16, 12>}, {transform_indices = @transform_3, window_bounds = array<i64: 2, 12>}]} {
    %c0_i32 = arith.constant 0 : i32
    %0 = arith.cmpi eq, %arg1, %c0_i32 : i32
    %1 = arith.extui %0 : i1 to i32
    %c0_i32_0 = arith.constant 0 : i32
    %2 = arith.cmpi ne, %1, %c0_i32_0 : i32
    scf.if %2 {
      %cst = arith.constant 0.000000e+00 : f32
      %12 = vector.broadcast %cst : f32 to vector<2x4x128xf32>
      %c0_13 = arith.constant 0 : index
      %c0_14 = arith.constant 0 : index
      %c0_15 = arith.constant 0 : index
      %13 = vector.load %arg6[%c0_13, %c0_14, %c0_15] : memref<2x4x128xf32, #tpu.memory_space<vmem>>, vector<2x4x128xf32>
      tpu.vector_store %arg6[%c0_13, %c0_14, %c0_15], %12 {strides = array<i32>} : memref<2x4x128xf32, #tpu.memory_space<vmem>>, vector<2x4x128xf32>,
    } else {
    }
    %c0 = arith.constant 0 : index
    %c0_1 = arith.constant 0 : index
    %c0_2 = arith.constant 0 : index
    %3 = vector.load %arg2[%c0, %c0_1, %c0_2] : memref<2x4x256xf32, #tpu.memory_space<vmem>>, vector<2x4x128xf32>
    %c0_3 = arith.constant 0 : index
    %c0_4 = arith.constant 0 : index
    %c128 = arith.constant 128 : index
    %4 = vector.load %arg2[%c0_3, %c0_4, %c128] : memref<2x4x256xf32, #tpu.memory_space<vmem>>, vector<2x4x128xf32>
    %5 = arith.addf %3, %4 : vector<2x4x128xf32>
    %c0_5 = arith.constant 0 : index
    %c0_6 = arith.constant 0 : index
    %c0_7 = arith.constant 0 : index
    %6 = vector.load %arg6[%c0_5, %c0_6, %c0_7] : memref<2x4x128xf32, #tpu.memory_space<vmem>>, vector<2x4x128xf32>
    %7 = arith.addf %6, %5 : vector<2x4x128xf32>
    %c0_8 = arith.constant 0 : index
    %c0_9 = arith.constant 0 : index
    %c0_10 = arith.constant 0 : index
    %8 = vector.load %arg6[%c0_8, %c0_9, %c0_10] : memref<2x4x128xf32, #tpu.memory_space<vmem>>, vector<2x4x128xf32>
    tpu.vector_store %arg6[%c0_8, %c0_9, %c0_10], %7 {strides = array<i32>} : memref<2x4x128xf32, #tpu.memory_space<vmem>>, vector<2x4x128xf32>,
    %c0_i32_11 = arith.constant 0 : i32
    %9 = arith.cmpi eq, %arg1, %c0_i32_11 : i32
    %10 = arith.extui %9 : i1 to i32
    %c0_i32_12 = arith.constant 0 : i32
    %11 = arith.cmpi ne, %10, %c0_i32_12 : i32
    scf.if %11 {
      %c0_13 = arith.constant 0 : index
      %c0_14 = arith.constant 0 : index
      %c0_15 = arith.constant 0 : index
      %12 = vector.load %arg6[%c0_13, %c0_14, %c0_15] : memref<2x4x128xf32, #tpu.memory_space<vmem>>, vector<2x4x128xf32>
      %cst = arith.constant dense<0.000000e+00> : vector<2x4xf32>
      %13 = vector.multi_reduction <add>, %12, %cst [2] : vector<2x4x128xf32> to vector<2x4xf32>
      %c0_16 = arith.constant 0 : index
      %c0_17 = arith.constant 0 : index
      %14 = vector.load %arg3[%c0_16, %c0_17] : memref<4x16xf32, #tpu.memory_space<vmem>>, vector<4x16xf32>
      %cst_18 = arith.constant dense<0.000000e+00> : vector<2x16xf32>
      %15 = tpu.matmul %13, %14, %cst_18 {dimension_numbers = #tpu.dot_dimension_numbers<[1], [0], [0], [1], [0, 0, 1, 1], [], []>} : vector<2x4xf32>, vector<4x16xf32>, vector<2x16xf32> -> vector<2x16xf32>
      %cst_19 = arith.constant 0.000000e+00 : f32
      %16 = vector.broadcast %cst_19 : f32 to vector<2x16xf32>
      %17 = arith.maximumf %15, %16 : vector<2x16xf32>
      %c0_20 = arith.constant 0 : index
      %c0_21 = arith.constant 0 : index
      %18 = vector.load %arg4[%c0_20, %c0_21] : memref<16x12xf32, #tpu.memory_space<vmem>>, vector<16x12xf32>
      %cst_22 = arith.constant dense<0.000000e+00> : vector<2x12xf32>
      %19 = tpu.matmul %17, %18, %cst_22 {dimension_numbers = #tpu.dot_dimension_numbers<[1], [0], [0], [1], [0, 0, 1, 1], [], []>} : vector<2x16xf32>, vector<16x12xf32>, vector<2x12xf32> -> vector<2x12xf32>
      %cst_23 = arith.constant 0.000000e+00 : f32
      %20 = vector.broadcast %cst_23 : f32 to vector<2x12xf32>
      %21 = arith.subf %20, %19 : vector<2x12xf32>
      %22 = math.exp %21 : vector<2x12xf32>
      %cst_24 = arith.constant 1.000000e+00 : f32
      %23 = vector.broadcast %cst_24 : f32 to vector<2x12xf32>
      %24 = arith.addf %23, %22 : vector<2x12xf32>
      %cst_25 = arith.constant 1.000000e+00 : f32
      %25 = vector.broadcast %cst_25 : f32 to vector<2x12xf32>
      %26 = arith.divf %25, %24 : vector<2x12xf32>
      %c0_26 = arith.constant 0 : index
      %c0_27 = arith.constant 0 : index
      %27 = vector.load %arg5[%c0_26, %c0_27] : memref<2x12xf32, #tpu.memory_space<vmem>>, vector<2x12xf32>
      tpu.vector_store %arg5[%c0_26, %c0_27], %26 {strides = array<i32>} : memref<2x12xf32, #tpu.memory_space<vmem>>, vector<2x12xf32>,
    } else {
    }
    return
  }
  func.func @transform_0(%arg0: i32, %arg1: i32) -> (i32, i32, i32) {
    %c0_i32 = arith.constant 0 : i32
    %c0_i32_0 = arith.constant 0 : i32
    return %arg0, %c0_i32, %arg1 : i32, i32, i32
  }
  func.func @transform_1(%arg0: i32, %arg1: i32) -> (i32, i32) {
    %c0_i32 = arith.constant 0 : i32
    %c0_i32_0 = arith.constant 0 : i32
    %c0_i32_1 = arith.constant 0 : i32
    return %c0_i32, %c0_i32_0 : i32, i32
  }
  func.func @transform_2(%arg0: i32, %arg1: i32) -> (i32, i32) {
    %c0_i32 = arith.constant 0 : i32
    %c0_i32_0 = arith.constant 0 : i32
    %c0_i32_1 = arith.constant 0 : i32
    return %c0_i32, %c0_i32_0 : i32, i32
  }
  func.func @transform_3(%arg0: i32, %arg1: i32) -> (i32, i32) {
    %c0_i32 = arith.constant 0 : i32
    %c0_i32_0 = arith.constant 0 : i32
    return %arg0, %c0_i32 : i32, i32
  }
}

</mosaic_0001>

<llo_original>
// kernel: tpu_custom_call.1
$region0: #{tpu_custom_call.1}
  #allocation0 [shape = 'u32[]', space=smem, size = 0x4, offset = 0x4, fixed_abs, tag = 'smem constant byte address 0x4 - core index']
  #allocation1 [shape = 'u32[144,128]{1,0:T(1,128)}', space=vmem, size = 0x12000, scoped, tag = 'internal scratch']
  #allocation2 [shape = 'f32[2,4,128]{2,1,0:T(4,128)}', space=vmem, size = 0x1000, scoped, tag = 'scratch operand']
  %s0 = inlined_call_operand.hbm [shape: f32[2,4,256], index: 0, kind: input, shape index: {}]
  %s1 = inlined_call_operand.hbm [shape: f32[4,16], index: 1, kind: input, shape index: {}]
  %s2 = inlined_call_operand.hbm [shape: f32[16,12], index: 2, kind: input, shape index: {}]
  %s3 = inlined_call_operand.hbm [shape: f32[2,12], index: 3, kind: output, shape index: {}]
  %s4 = sld [smem:[#allocation0]]
  $region42: #{tpu_custom_call.1} parent=0
    _
  %s6 = ssub.s32 1, %s4
  %s7 = scalar_select 0, %s6, %s4
  $region1: #{tpu_custom_call.1} parent=0
    #allocation3 [shape = 'u8[8192]{0}', space=vmem, size = 0x2000, scoped, tag = 'input window, operand 0, single buffered']
    #allocation4 [shape = 's32[1]{0}', space=sflag, size = 0x4, scoped, tag = 'scoped memory for tpu_custom_call.1']
    #allocation5 [shape = 's32[1]{0}', space=sflag, size = 0x4, scoped, tag = 'scoped memory for tpu_custom_call.1']
    #allocation6 [shape = 'u8[2048]{0}', space=vmem, size = 0x800, scoped, tag = 'input window, operand 1, single buffered']
    #allocation7 [shape = 's32[1]{0}', space=sflag, size = 0x4, scoped, tag = 'scoped memory for tpu_custom_call.1']
    #allocation8 [shape = 'u8[8192]{0}', space=vmem, size = 0x2000, scoped, tag = 'input window, operand 2, single buffered']
    #allocation9 [shape = 'u8[1024]{0}', space=vmem, size = 0x400, scoped, tag = 'output window, operand 0, single buffered']
    %8 = vsyncpa [#allocation4], 0
    %9 = vsyncpa [#allocation7], 0
    %10 = vsyncpa [#allocation5], 0
    // Predicated region
    $region2: #{tpu_custom_call.1} parent=1 // pred_check
      _
    $region3: #{tpu_custom_call.1} parent=1 // pred_check_branch
      %12 = sbr.rel (0) target = $region5
    $region4: #{tpu_custom_call.1} parent=1 // pred_region
      %s14 = ssub.s32 256, 256
      %15 = vsyncadd [#allocation4], %s14
      %s16 = sshll.u32 [#allocation3], 4
      %s17 = int_to_ptr.vmem [resolvable:$true] %s16
      %22 = dma.hbm_to_vmem [thread:$0]  %s0, 256, %s17, [#allocation4], 128, 128, 8
    $region5: #{tpu_custom_call.1} parent=1 // pred_fallthru
      _
    // Predicated region
    $region6: #{tpu_custom_call.1} parent=1 // pred_check
      _
    $region7: #{tpu_custom_call.1} parent=1 // pred_check_branch
      %24 = sbr.rel (0) target = $region9
    $region8: #{tpu_custom_call.1} parent=1 // pred_region
      %s26 = ssub.s32 64, 64
      %27 = vsyncadd [#allocation7], %s26
      %s29 = sshll.u32 [#allocation6], 4
      %s30 = int_to_ptr.vmem [resolvable:$true] %s29
      %32 = dma.hbm_to_vmem [thread:$0]  %s1, 64, %s30, [#allocation7]
    $region9: #{tpu_custom_call.1} parent=1 // pred_fallthru
      _
    // Predicated region
    $region10: #{tpu_custom_call.1} parent=1 // pred_check
      _
    $region11: #{tpu_custom_call.1} parent=1 // pred_check_branch
      %34 = sbr.rel (0) target = $region13
    $region12: #{tpu_custom_call.1} parent=1 // pred_region
      %s36 = ssub.s32 256, 256
      %37 = vsyncadd [#allocation7], %s36
      %s38 = sshll.u32 [#allocation8], 4
      %s39 = int_to_ptr.vmem [resolvable:$true] %s38
      %44 = dma.hbm_to_vmem [thread:$0]  %s2, 256, %s39, [#allocation7], 128, 128, 8
    $region13: #{tpu_custom_call.1} parent=1 // pred_fallthru
      _
    // Predicated region
    $region14: #{tpu_custom_call.1} parent=1 // pred_check
      _
    $region15: #{tpu_custom_call.1} parent=1 // pred_check_branch
      %46 = sbr.rel (0) target = $region17
    $region16: #{tpu_custom_call.1} parent=1 // pred_region
      %47 = dma.done [#allocation4], 256
    $region17: #{tpu_custom_call.1} parent=1 // pred_fallthru
      _
    // Predicated region
    $region18: #{tpu_custom_call.1} parent=1 // pred_check
      _
    $region19: #{tpu_custom_call.1} parent=1 // pred_check_branch
      %49 = sbr.rel (0) target = $region21
    $region20: #{tpu_custom_call.1} parent=1 // pred_region
      %50 = dma.done [#allocation7], 64
    $region21: #{tpu_custom_call.1} parent=1 // pred_fallthru
      _
    // Predicated region
    $region22: #{tpu_custom_call.1} parent=1 // pred_check
      _
    $region23: #{tpu_custom_call.1} parent=1 // pred_check_branch
      %52 = sbr.rel (0) target = $region25
    $region24: #{tpu_custom_call.1} parent=1 // pred_region
      %53 = dma.done [#allocation7], 256
    $region25: #{tpu_custom_call.1} parent=1 // pred_fallthru
      _
    %p54 = scmp.eq.s32.totalorder 0, 0
    // Predicated region
    $region26: #{tpu_custom_call.1} parent=1 // pred_check
      %p55 = pneg %p54
    $region27: #{tpu_custom_call.1} parent=1 // pred_check_branch
      %57 = sbr.rel (%p55) target = $region29
    $region28: #{tpu_custom_call.1} parent=1 // pred_region
      %58 = vst [vmem:[#allocation2] sm:$0xf] 0.0
      %59 = vst [vmem:[#allocation2 + $0x4] sm:$0xf] 0.0
    $region29: #{tpu_custom_call.1} parent=1 // pred_fallthru
      _
    %v60 = vld [vmem:[#allocation3] sm:$0xf]
    %v61 = vld [vmem:[#allocation3 + $0x8] sm:$0xf]
    %v62 = vld [vmem:[#allocation3 + $0x4] sm:$0xf]
    %v63 = vld [vmem:[#allocation3 + $0xc] sm:$0xf]
    %v64 = vadd.f32 %v60, %v62
    %v65 = vadd.f32 %v61, %v63
    %v66 = vld [vmem:[#allocation2] sm:$0xf]
    %v67 = vld [vmem:[#allocation2 + $0x4] sm:$0xf]
    %v68 = vadd.f32 %v66, %v64
    %v69 = vadd.f32 %v67, %v65
    %70 = vst [vmem:[#allocation2] sm:$0xf] %v68
    %71 = vst [vmem:[#allocation2 + $0x4] sm:$0xf] %v69
    // Predicated region
    $region30: #{tpu_custom_call.1} parent=1 // pred_check
      %p72 = pneg %p54
    $region31: #{tpu_custom_call.1} parent=1 // pred_check_branch
      %74 = sbr.rel (%p72) target = $region33
    $region32: #{tpu_custom_call.1} parent=1 // pred_region
      %v75 = vld [vmem:[#allocation2] sm:$0xf]
      %v76 = vld [vmem:[#allocation2 + $0x4] sm:$0xf]
      %vm77 = vcmask 1043456
      %v78 = vsel %vm77, %v75, 0.0
      %79 = vadd.xlane.f32.xlu0 %v78
      %v80 = vpop.xlane.xlu0 %79
      %v81 = vsel %vm77, %v76, 0.0
      %82 = vadd.xlane.f32.xlu0 %v81
      %v83 = vpop.xlane.xlu0 %82
      %v84 = vld [vmem:[#allocation6] sm:$0xf]
      %v87 = vlaneseq
      %v88 = vand.u32 %v87, 127
      %v89 = vlaneseq
      %v90 = vshrl.u32 %v89, 7
      %v91 = vsub.s32 %v88, %v90
      %v92 = vrot.slane %v80, %v91
      %v93 = vlaneseq
      %v94 = vshrl.u32 %v93, 7
      %v95 = vsub.s32 %v88, %v94
      %v96 = vrot.slane %v83, %v95
      %vm97 = vcmask 1041409
      %v98 = vsel %vm97, %v96, %v92
      %vm99 = vcmask 31744
      %v100 = vsel %vm99, %v98, 0
      %v103 = vsel %vm77, %v84, 0
      %105 = vmatprep.subr.mxu0 0.0
      %106 = vmatpush1.msra.mxu0 %v103
      %107 = vmatprep.subr.mxu0 0.0
      %108 = vmatpush1.msra.mxu0 0.0
      %109 = vmatprep.subr.mxu0 0.0
      %110 = vmatpush1.msra.mxu0 0.0
      %111 = vmatprep.subr.mxu0 0.0
      %112 = vmatpush1.msra.mxu0 0.0
      %113 = vmatprep.subr.mxu0 0.0
      %114 = vmatpush1.msra.mxu0 0.0
      %115 = vmatprep.subr.mxu0 0.0
      %116 = vmatpush1.msra.mxu0 0.0
      %117 = vmatprep.subr.mxu0 0.0
      %118 = vmatpush1.msra.mxu0 0.0
      %119 = vmatprep.subr.mxu0 0.0
      %120 = vmatpush1.msra.mxu0 0.0
      %121 = vmatprep.subr.mxu0 0.0
      %122 = vmatpush1.msra.mxu0 0.0
      %123 = vmatprep.subr.mxu0 0.0
      %124 = vmatpush1.msra.mxu0 0.0
      %125 = vmatprep.subr.mxu0 0.0
      %126 = vmatpush1.msra.mxu0 0.0
      %127 = vmatprep.subr.mxu0 0.0
      %128 = vmatpush1.msra.mxu0 0.0
      %129 = vmatprep.subr.mxu0 0.0
      %130 = vmatpush1.msra.mxu0 0.0
      %131 = vmatprep.subr.mxu0 0.0
      %132 = vmatpush1.msra.mxu0 0.0
      %133 = vmatprep.subr.mxu0 0.0
      %134 = vmatpush1.msra.mxu0 0.0
      %135 = vmatprep.subr.mxu0 0.0
      %136 = vmatpush1.msra.mxu0 0.0
      %137 = vmatprep.subr.mxu0 0.0
      %138 = vmatpush1.msra.mxu0 0.0
      %139 = vmatprep.subr.mxu0 0.0
      %140 = vmatpush1.msra.mxu0 0.0
      %141 = vmatprep.subr.mxu0 0.0
      %142 = vmatpush1.msra.mxu0 0.0
      %143 = vmatprep.subr.mxu0 0.0
      %144 = vmatpush1.msra.mxu0 0.0
      %145 = vmatprep.subr.mxu0 0.0
      %146 = vmatpush1.msra.mxu0 0.0
      %147 = vmatprep.subr.mxu0 0.0
      %148 = vmatpush1.msra.mxu0 0.0
      %149 = vmatprep.subr.mxu0 0.0
      %150 = vmatpush1.msra.mxu0 0.0
      %151 = vmatprep.subr.mxu0 0.0
      %152 = vmatpush1.msra.mxu0 0.0
      %153 = vmatprep.subr.mxu0 0.0
      %154 = vmatpush1.msra.mxu0 0.0
      %155 = vmatprep.subr.mxu0 0.0
      %156 = vmatpush1.msra.mxu0 0.0
      %157 = vmatprep.subr.mxu0 0.0
      %158 = vmatpush1.msra.mxu0 0.0
      %159 = vmatprep.subr.mxu0 0.0
      %160 = vmatpush1.msra.mxu0 0.0
      %161 = vmatprep.subr.mxu0 0.0
      %162 = vmatpush1.msra.mxu0 0.0
      %163 = vmatprep.subr.mxu0 0.0
      %164 = vmatpush1.msra.mxu0 0.0
      %165 = vmatprep.subr.mxu0 0.0
      %166 = vmatpush1.msra.mxu0 0.0
      %167 = vmatprep.subr.mxu0 0.0
      %168 = vmatpush1.msra.mxu0 0.0
      %169 = vmatprep.mubr.f32.mxu0 0.0
      %170 = vmatmul.mubr.f32.gmra.mrb[0].mxu0 %v100
      %v171 = vpop.f32.mrb[0].mxu0
      %v172 = vadd.f32 0.0, %v171
      %v173 = vpop.f32.mrb[0].mxu0
      %174 = vdwg.mxu0
      %v175 = vmax.f32 %v172, 0.0
      %v176 = vld [vmem:[#allocation8] sm:$0xff]
      %v177 = vld [vmem:[#allocation8 + $0x8] sm:$0xff]
      %vm178 = vcmask 130048
      %v180 = vsel %vm178, %v175, 0
      %182 = vmatprep.subr.mxu0 0.0
      %183 = vmatpush1.msra.mxu0 %v176
      %184 = vmatprep.subr.mxu0 0.0
      %185 = vmatpush1.msra.mxu0 %v177
      %186 = vmatprep.subr.mxu0 0.0
      %187 = vmatpush1.msra.mxu0 0.0
      %188 = vmatprep.subr.mxu0 0.0
      %189 = vmatpush1.msra.mxu0 0.0
      %190 = vmatprep.subr.mxu0 0.0
      %191 = vmatpush1.msra.mxu0 0.0
      %192 = vmatprep.subr.mxu0 0.0
      %193 = vmatpush1.msra.mxu0 0.0
      %194 = vmatprep.subr.mxu0 0.0
      %195 = vmatpush1.msra.mxu0 0.0
      %196 = vmatprep.subr.mxu0 0.0
      %197 = vmatpush1.msra.mxu0 0.0
      %198 = vmatprep.subr.mxu0 0.0
      %199 = vmatpush1.msra.mxu0 0.0
      %200 = vmatprep.subr.mxu0 0.0
      %201 = vmatpush1.msra.mxu0 0.0
      %202 = vmatprep.subr.mxu0 0.0
      %203 = vmatpush1.msra.mxu0 0.0
      %204 = vmatprep.subr.mxu0 0.0
      %205 = vmatpush1.msra.mxu0 0.0
      %206 = vmatprep.subr.mxu0 0.0
      %207 = vmatpush1.msra.mxu0 0.0
      %208 = vmatprep.subr.mxu0 0.0
      %209 = vmatpush1.msra.mxu0 0.0
      %210 = vmatprep.subr.mxu0 0.0
      %211 = vmatpush1.msra.mxu0 0.0
      %212 = vmatprep.subr.mxu0 0.0
      %213 = vmatpush1.msra.mxu0 0.0
      %214 = vmatprep.subr.mxu0 0.0
      %215 = vmatpush1.msra.mxu0 0.0
      %216 = vmatprep.subr.mxu0 0.0
      %217 = vmatpush1.msra.mxu0 0.0
      %218 = vmatprep.subr.mxu0 0.0
      %219 = vmatpush1.msra.mxu0 0.0
      %220 = vmatprep.subr.mxu0 0.0
      %221 = vmatpush1.msra.mxu0 0.0
      %222 = vmatprep.subr.mxu0 0.0
      %223 = vmatpush1.msra.mxu0 0.0
      %224 = vmatprep.subr.mxu0 0.0
      %225 = vmatpush1.msra.mxu0 0.0
      %226 = vmatprep.subr.mxu0 0.0
      %227 = vmatpush1.msra.mxu0 0.0
      %228 = vmatprep.subr.mxu0 0.0
      %229 = vmatpush1.msra.mxu0 0.0
      %230 = vmatprep.subr.mxu0 0.0
      %231 = vmatpush1.msra.mxu0 0.0
      %232 = vmatprep.subr.mxu0 0.0
      %233 = vmatpush1.msra.mxu0 0.0
      %234 = vmatprep.subr.mxu0 0.0
      %235 = vmatpush1.msra.mxu0 0.0
      %236 = vmatprep.subr.mxu0 0.0
      %237 = vmatpush1.msra.mxu0 0.0
      %238 = vmatprep.subr.mxu0 0.0
      %239 = vmatpush1.msra.mxu0 0.0
      %240 = vmatprep.subr.mxu0 0.0
      %241 = vmatpush1.msra.mxu0 0.0
      %242 = vmatprep.subr.mxu0 0.0
      %243 = vmatpush1.msra.mxu0 0.0
      %244 = vmatprep.subr.mxu0 0.0
      %245 = vmatpush1.msra.mxu0 0.0
      %246 = vmatprep.mubr.f32.mxu0 0.0
      %247 = vmatmul.mubr.f32.gmra.mrb[0].mxu0 %v180
      %v248 = vpop.f32.mrb[0].mxu0
      %v249 = vadd.f32 0.0, %v248
      %v250 = vpop.f32.mrb[0].mxu0
      %251 = vdwg.mxu0
      %v252 = vsub.f32 0.0, %v249
      %v253 = vmul.f32 %v252, 1.442695
      %v254 = vpow.pop %v253
      %v255 = vadd.f32 %v254, 1.0
      %v256 = vrcp.pop %v255
      %v257 = vmul.f32 1.0, %v256
      %vm258 = vcmask 91136
      %259 = vst.msk [vmem:[#allocation9] sm:$0x3] %vm258, %v257
    $region33: #{tpu_custom_call.1} parent=1 // pred_fallthru
      _
    // Predicated region
    $region34: #{tpu_custom_call.1} parent=1 // pred_check
      _
    $region35: #{tpu_custom_call.1} parent=1 // pred_check_branch
      %261 = sbr.rel (0) target = $region37
    $region36: #{tpu_custom_call.1} parent=1 // pred_region
      %s263 = ssub.s32 32, 32
      %264 = vsyncadd [#allocation5], %s263
      %s266 = sshll.u32 [#allocation9], 4
      %s267 = int_to_ptr.vmem [resolvable:$true] %s266
      %269 = dma.vmem_to_hbm [thread:$0]  %s267, 32, %s3, [#allocation5]
    $region37: #{tpu_custom_call.1} parent=1 // pred_fallthru
      _
    // Predicated region
    $region38: #{tpu_custom_call.1} parent=1 // pred_check
      _
    $region39: #{tpu_custom_call.1} parent=1 // pred_check_branch
      %271 = sbr.rel (0) target = $region41
    $region40: #{tpu_custom_call.1} parent=1 // pred_region
      %272 = dma.done [#allocation5], 32
    $region41: #{tpu_custom_call.1} parent=1 // pred_fallthru
      _
    %273 = vsyncpa [#allocation4], 1
    %274 = vsyncpa [#allocation7], 1
    %275 = vsyncpa [#allocation5], 1

</llo_original>
